<compile_context>
chip_gen: v6e
topology: v6e:2x2x1
jax: 0.10.0
libtpu: 0.0.40
codegen_flags: <defaults>
</compile_context>

<pallas_src>
import functools

import jax
import jax.numpy as jnp
from jax.experimental import pallas as pl
from jax.experimental.pallas import tpu as pltpu

HIDDEN = 64                 # per-branch hidden size (from the PyTorch module)
FUSED_HIDDEN = 2 * HIDDEN   # 128 -> exactly fills the 128-lane vreg
OUT_PAD = 128               # lane-dense output slab width


def actor_critic_kernel(x_ref, w1_ref, b1_ref, w2_ref, b2_ref, w3_ref, b3_ref,
                        out_ref, *, action_dim):
    x = x_ref[...]                                                   # [Bt, obs]

    # layer 1: fused (policy | value) hidden -> [Bt, 128]
    h = jnp.tanh(
        jnp.dot(x, w1_ref[...], preferred_element_type=jnp.float32) + b1_ref[...]
    )
    # layer 2: block-diagonal [128, 128]
    h = jnp.tanh(
        jnp.dot(h, w2_ref[...], preferred_element_type=jnp.float32) + b2_ref[...]
    )
    # layer 3: block-diagonal, zero-padded to OUT_PAD lanes.
    # lanes [0, A) = policy logits, lane A = value, lanes > A = 0.
    z = jnp.dot(h, w3_ref[...], preferred_element_type=jnp.float32) + b3_ref[...]

    lane = jax.lax.broadcasted_iota(jnp.int32, z.shape, dimension=1)
    is_logit = lane < action_dim

    # numerically-stable softmax over the logit lanes only (matches
    # F.softmax(dim=-1)); padded lanes are masked to a huge negative so their
    # exp() contributes exactly 0 to the denominator.
    neg_big = jnp.float32(-1e30)
    logits = jnp.where(is_logit, z, neg_big)
    m = jnp.max(logits, axis=-1, keepdims=True)
    e = jnp.exp(logits - m)
    denom = jnp.sum(e, axis=-1, keepdims=True)
    probs = e * pl.reciprocal(denom, approx=False)

    # single lane-dense output slab: probs | value | zeros
    out_ref[...] = jnp.where(
        is_logit, probs, jnp.where(lane == action_dim, z, 0.0)
    )


def fuse_params(p, action_dim):
    """Concatenate / block-diagonalize the 6 Linear layers into 3 fused slabs."""
    zeros_hh = jnp.zeros((HIDDEN, HIDDEN), jnp.float32)

    w1 = jnp.concatenate([p["wp1"], p["wv1"]], axis=1)                # [obs, 128]
    b1 = jnp.concatenate([p["bp1"], p["bv1"]], axis=1)                # [1, 128]

    w2 = jnp.block([[p["wp2"], zeros_hh],
                    [zeros_hh, p["wv2"]]])                            # [128, 128]
    b2 = jnp.concatenate([p["bp2"], p["bv2"]], axis=1)                # [1, 128]

    w3_top = jnp.concatenate(
        [p["wp3"], jnp.zeros((HIDDEN, 1), jnp.float32)], axis=1)
    w3_bot = jnp.concatenate(
        [jnp.zeros((HIDDEN, action_dim), jnp.float32), p["wv3"]], axis=1)
    w3 = jnp.concatenate([w3_top, w3_bot], axis=0)                    # [128, A+1]
    b3 = jnp.concatenate([p["bp3"], p["bv3"]], axis=1)                # [1, A+1]

    pad = OUT_PAD - (action_dim + 1)
    w3 = jnp.pad(w3, ((0, 0), (0, pad)))                              # [128, 128]
    b3 = jnp.pad(b3, ((0, 0), (0, pad)))                              # [1, 128]
    return w1, b1, w2, b2, w3, b3


def actor_critic_forward(state, params, *, b_tile=1024):
    """state: [B, obs_dim] float32; params: dict of transposed weights/biases.

    Returns (probs [B, A], v [B, 1]).
    """
    B, obs = state.shape
    A = params["wp3"].shape[1]
    assert A + 1 <= OUT_PAD, "action_dim too large for the fused output slab"

    w1, b1, w2, b2, w3, b3 = fuse_params(params, A)

    # batch tile: multiple of 8 (f32 sublane packing), capped at b_tile; pad B
    # up to a multiple of the tile so every block is full.
    bt = min(b_tile, max(8, ((B + 7) // 8) * 8))
    bt = ((bt + 7) // 8) * 8
    n_blocks = pl.cdiv(B, bt)
    B_pad = n_blocks * bt
    if B_pad != B:
        state = jnp.pad(state, ((0, B_pad - B), (0, 0)))

    flops = 2 * B_pad * (obs * FUSED_HIDDEN
                         + FUSED_HIDDEN * FUSED_HIDDEN
                         + FUSED_HIDDEN * OUT_PAD)
    transcendentals = B_pad * (2 * FUSED_HIDDEN + OUT_PAD)
    bytes_accessed = 4 * (B_pad * obs + B_pad * OUT_PAD
                          + w1.size + b1.size + w2.size + b2.size
                          + w3.size + b3.size)

    out = pl.pallas_call(
        functools.partial(actor_critic_kernel, action_dim=A),
        out_shape=jax.ShapeDtypeStruct((B_pad, OUT_PAD), jnp.float32),
        grid=(n_blocks,),
        in_specs=[
            pl.BlockSpec((bt, obs), lambda i: (i, 0)),                 # state
            pl.BlockSpec((obs, FUSED_HIDDEN), lambda i: (0, 0)),       # W1
            pl.BlockSpec((1, FUSED_HIDDEN), lambda i: (0, 0)),         # b1
            pl.BlockSpec((FUSED_HIDDEN, FUSED_HIDDEN), lambda i: (0, 0)),  # W2
            pl.BlockSpec((1, FUSED_HIDDEN), lambda i: (0, 0)),         # b2
            pl.BlockSpec((FUSED_HIDDEN, OUT_PAD), lambda i: (0, 0)),   # W3
            pl.BlockSpec((1, OUT_PAD), lambda i: (0, 0)),              # b3
        ],
        out_specs=pl.BlockSpec((bt, OUT_PAD), lambda i: (i, 0)),
        compiler_params=pltpu.CompilerParams(
            dimension_semantics=("parallel",)),
        cost_estimate=pl.CostEstimate(
            flops=flops,
            transcendentals=transcendentals,
            bytes_accessed=bytes_accessed),
    )(state, w1, b1, w2, b2, w3, b3)

    probs = out[:B, :A]
    v = out[:B, A:A + 1]
    return probs, v


def init_params(key, obs_dim, action_dim, hidden=HIDDEN):
    """Deterministic init mimicking nn.Linear default (U(-1/sqrt(fan_in), +))."""
    ks = jax.random.split(key, 12)

    def lin(kw, kb, fan_in, fan_out):
        bound = 1.0 / jnp.sqrt(fan_in)
        w = jax.random.uniform(kw, (fan_in, fan_out), jnp.float32, -bound, bound)
        b = jax.random.uniform(kb, (1, fan_out), jnp.float32, -bound, bound)
        return w, b

    p = {}
    p["wp1"], p["bp1"] = lin(ks[0], ks[1], obs_dim, hidden)
    p["wp2"], p["bp2"] = lin(ks[2], ks[3], hidden, hidden)
    p["wp3"], p["bp3"] = lin(ks[4], ks[5], hidden, action_dim)
    p["wv1"], p["bv1"] = lin(ks[6], ks[7], obs_dim, hidden)
    p["wv2"], p["bv2"] = lin(ks[8], ks[9], hidden, hidden)
    p["wv3"], p["bv3"] = lin(ks[10], ks[11], hidden, 1)
    return p


if __name__ == "__main__":
    key = jax.random.PRNGKey(0)
    k_state, k_params = jax.random.split(key)

    B, OBS, ACT = 8, 16, 4
    state = jax.random.normal(k_state, (B, OBS), jnp.float32)
    params = init_params(k_params, OBS, ACT)

    probs, v = jax.jit(actor_critic_forward)(state, params)
    jax.block_until_ready((probs, v))

    # sanity checks against a pure-JAX reference of the original module
    def ref(x, p):
        h = jnp.tanh(x @ p["wp1"] + p["bp1"])
        h = jnp.tanh(h @ p["wp2"] + p["bp2"])
        pr = jax.nn.softmax(h @ p["wp3"] + p["bp3"], axis=-1)
        u = jnp.tanh(x @ p["wv1"] + p["bv1"])
        u = jnp.tanh(u @ p["wv2"] + p["bv2"])
        return pr, u @ p["wv3"] + p["bv3"]

    pr_ref, v_ref = ref(state, params)
    assert probs.shape == (B, ACT) and v.shape == (B, 1)
    assert jnp.allclose(jnp.sum(probs, axis=-1), 1.0, atol=1e-5)
    assert jnp.allclose(probs, pr_ref, atol=1e-5)
    assert jnp.allclose(v, v_ref, atol=1e-5)

    # TODO(synk): torch.distributions.Categorical itself is not representable
    # in a kernel; the kernel returns the probability tensor parameterizing it.
    print("KERNEL_OK")
</pallas_src>

<mosaic_0001>
module attributes {stable_mosaic.version = 11 : i64} {
  func.func @actor_critic_kernel(%arg0: i32, %arg1: memref<8x16xf32, #tpu.memory_space<vmem>>, %arg2: memref<16x128xf32, #tpu.memory_space<vmem>>, %arg3: memref<1x128xf32, #tpu.memory_space<vmem>>, %arg4: memref<128x128xf32, #tpu.memory_space<vmem>>, %arg5: memref<1x128xf32, #tpu.memory_space<vmem>>, %arg6: memref<128x128xf32, #tpu.memory_space<vmem>>, %arg7: memref<1x128xf32, #tpu.memory_space<vmem>>, %arg8: memref<8x128xf32, #tpu.memory_space<vmem>>) attributes {dimension_semantics = [#tpu.dimension_semantics<parallel>], iteration_bounds = array<i64: 1>, scalar_prefetch = 0 : i64, scratch_operands = 0 : i64, tpu.core_type = #tpu.core_type<tc>, window_params = [{transform_indices = @transform_0, window_bounds = array<i64: 8, 16>}, {pipeline_mode = #tpu.pipeline_mode<synchronous>, transform_indices = @transform_1, window_bounds = array<i64: 16, 128>}, {pipeline_mode = #tpu.pipeline_mode<synchronous>, transform_indices = @transform_2, window_bounds = array<i64: 1, 128>}, {pipeline_mode = #tpu.pipeline_mode<synchronous>, transform_indices = @transform_3, window_bounds = array<i64: 128, 128>}, {pipeline_mode = #tpu.pipeline_mode<synchronous>, transform_indices = @transform_4, window_bounds = array<i64: 1, 128>}, {pipeline_mode = #tpu.pipeline_mode<synchronous>, transform_indices = @transform_5, window_bounds = array<i64: 128, 128>}, {pipeline_mode = #tpu.pipeline_mode<synchronous>, transform_indices = @transform_6, window_bounds = array<i64: 1, 128>}, {transform_indices = @transform_7, window_bounds = array<i64: 8, 128>}]} {
    %c0 = arith.constant 0 : index
    %c0_0 = arith.constant 0 : index
    %0 = vector.load %arg1[%c0, %c0_0] : memref<8x16xf32, #tpu.memory_space<vmem>>, vector<8x16xf32>
    %c0_1 = arith.constant 0 : index
    %c0_2 = arith.constant 0 : index
    %1 = vector.load %arg2[%c0_1, %c0_2] : memref<16x128xf32, #tpu.memory_space<vmem>>, vector<16x128xf32>
    %cst = arith.constant dense<0.000000e+00> : vector<8x128xf32>
    %2 = tpu.matmul %0, %1, %cst {dimension_numbers = #tpu.dot_dimension_numbers<[1], [0], [0], [1], [0, 0, 1, 1], [], []>} : vector<8x16xf32>, vector<16x128xf32>, vector<8x128xf32> -> vector<8x128xf32>
    %c0_3 = arith.constant 0 : index
    %c0_4 = arith.constant 0 : index
    %3 = vector.load %arg3[%c0_3, %c0_4] : memref<1x128xf32, #tpu.memory_space<vmem>>, vector<1x128xf32>
    %4 = vector.broadcast %3 : vector<1x128xf32> to vector<8x128xf32>
    %5 = arith.addf %2, %4 : vector<8x128xf32>
    %6 = math.tanh %5 : vector<8x128xf32>
    %c0_5 = arith.constant 0 : index
    %c0_6 = arith.constant 0 : index
    %7 = vector.load %arg4[%c0_5, %c0_6] : memref<128x128xf32, #tpu.memory_space<vmem>>, vector<128x128xf32>
    %cst_7 = arith.constant dense<0.000000e+00> : vector<8x128xf32>
    %8 = tpu.matmul %6, %7, %cst_7 {dimension_numbers = #tpu.dot_dimension_numbers<[1], [0], [0], [1], [0, 0, 1, 1], [], []>} : vector<8x128xf32>, vector<128x128xf32>, vector<8x128xf32> -> vector<8x128xf32>
    %c0_8 = arith.constant 0 : index
    %c0_9 = arith.constant 0 : index
    %9 = vector.load %arg5[%c0_8, %c0_9] : memref<1x128xf32, #tpu.memory_space<vmem>>, vector<1x128xf32>
    %10 = vector.broadcast %9 : vector<1x128xf32> to vector<8x128xf32>
    %11 = arith.addf %8, %10 : vector<8x128xf32>
    %12 = math.tanh %11 : vector<8x128xf32>
    %c0_10 = arith.constant 0 : index
    %c0_11 = arith.constant 0 : index
    %13 = vector.load %arg6[%c0_10, %c0_11] : memref<128x128xf32, #tpu.memory_space<vmem>>, vector<128x128xf32>
    %cst_12 = arith.constant dense<0.000000e+00> : vector<8x128xf32>
    %14 = tpu.matmul %12, %13, %cst_12 {dimension_numbers = #tpu.dot_dimension_numbers<[1], [0], [0], [1], [0, 0, 1, 1], [], []>} : vector<8x128xf32>, vector<128x128xf32>, vector<8x128xf32> -> vector<8x128xf32>
    %c0_13 = arith.constant 0 : index
    %c0_14 = arith.constant 0 : index
    %15 = vector.load %arg7[%c0_13, %c0_14] : memref<1x128xf32, #tpu.memory_space<vmem>>, vector<1x128xf32>
    %16 = vector.broadcast %15 : vector<1x128xf32> to vector<8x128xf32>
    %17 = arith.addf %14, %16 : vector<8x128xf32>
    %18 = tpu.iota {dimensions = array<i32: 1>} : vector<8x128xi32>
    %c4_i32 = arith.constant 4 : i32
    %19 = vector.broadcast %c4_i32 : i32 to vector<8x128xi32>
    %20 = arith.cmpi slt, %18, %19 : vector<8x128xi32>
    %cst_15 = arith.constant -1.000000e+30 : f32
    %21 = vector.broadcast %cst_15 : f32 to vector<8x128xf32>
    %22 = arith.select %20, %17, %21 : vector<8x128xi1>, vector<8x128xf32>
    %cst_16 = arith.constant dense<0xFF800000> : vector<8xf32>
    %23 = vector.multi_reduction <maximumf>, %22, %cst_16 [1] : vector<8x128xf32> to vector<8xf32>
    %24 = vector.shape_cast %23 : vector<8xf32> to vector<8x1xf32>
    %25 = vector.broadcast %24 : vector<8x1xf32> to vector<8x128xf32>
    %26 = arith.subf %22, %25 : vector<8x128xf32>
    %27 = math.exp %26 : vector<8x128xf32>
    %cst_17 = arith.constant dense<0.000000e+00> : vector<8xf32>
    %28 = vector.multi_reduction <add>, %27, %cst_17 [1] : vector<8x128xf32> to vector<8xf32>
    %29 = vector.shape_cast %28 : vector<8xf32> to vector<8x1xf32>
    %30 = tpu.reciprocal %29 : vector<8x1xf32> -> vector<8x1xf32>
    %31 = vector.broadcast %30 : vector<8x1xf32> to vector<8x128xf32>
    %32 = arith.mulf %27, %31 : vector<8x128xf32>
    %c4_i32_18 = arith.constant 4 : i32
    %33 = vector.broadcast %c4_i32_18 : i32 to vector<8x128xi32>
    %34 = arith.cmpi eq, %18, %33 : vector<8x128xi32>
    %cst_19 = arith.constant 0.000000e+00 : f32
    %35 = vector.broadcast %cst_19 : f32 to vector<8x128xf32>
    %36 = arith.select %34, %17, %35 : vector<8x128xi1>, vector<8x128xf32>
    %37 = arith.select %20, %32, %36 : vector<8x128xi1>, vector<8x128xf32>
    %c0_20 = arith.constant 0 : index
    %c0_21 = arith.constant 0 : index
    %38 = vector.load %arg8[%c0_20, %c0_21] : memref<8x128xf32, #tpu.memory_space<vmem>>, vector<8x128xf32>
    tpu.vector_store %arg8[%c0_20, %c0_21], %37 {strides = array<i32>} : memref<8x128xf32, #tpu.memory_space<vmem>>, vector<8x128xf32>,
    return
  }
  func.func @transform_0(%arg0: i32) -> (i32, i32) {
    %c0_i32 = arith.constant 0 : i32
    %c0_i32_0 = arith.constant 0 : i32
    return %arg0, %c0_i32 : i32, i32
  }
  func.func @transform_1(%arg0: i32) -> (i32, i32) {
    %c0_i32 = arith.constant 0 : i32
    %c0_i32_0 = arith.constant 0 : i32
    %c0_i32_1 = arith.constant 0 : i32
    return %c0_i32, %c0_i32_0 : i32, i32
  }
  func.func @transform_2(%arg0: i32) -> (i32, i32) {
    %c0_i32 = arith.constant 0 : i32
    %c0_i32_0 = arith.constant 0 : i32
    %c0_i32_1 = arith.constant 0 : i32
    return %c0_i32, %c0_i32_0 : i32, i32
  }
  func.func @transform_3(%arg0: i32) -> (i32, i32) {
    %c0_i32 = arith.constant 0 : i32
    %c0_i32_0 = arith.constant 0 : i32
    %c0_i32_1 = arith.constant 0 : i32
    return %c0_i32, %c0_i32_0 : i32, i32
  }
  func.func @transform_4(%arg0: i32) -> (i32, i32) {
    %c0_i32 = arith.constant 0 : i32
    %c0_i32_0 = arith.constant 0 : i32
    %c0_i32_1 = arith.constant 0 : i32
    return %c0_i32, %c0_i32_0 : i32, i32
  }
  func.func @transform_5(%arg0: i32) -> (i32, i32) {
    %c0_i32 = arith.constant 0 : i32
    %c0_i32_0 = arith.constant 0 : i32
    %c0_i32_1 = arith.constant 0 : i32
    return %c0_i32, %c0_i32_0 : i32, i32
  }
  func.func @transform_6(%arg0: i32) -> (i32, i32) {
    %c0_i32 = arith.constant 0 : i32
    %c0_i32_0 = arith.constant 0 : i32
    %c0_i32_1 = arith.constant 0 : i32
    return %c0_i32, %c0_i32_0 : i32, i32
  }
  func.func @transform_7(%arg0: i32) -> (i32, i32) {
    %c0_i32 = arith.constant 0 : i32
    %c0_i32_0 = arith.constant 0 : i32
    return %arg0, %c0_i32 : i32, i32
  }
}

</mosaic_0001>

<llo_original>
// kernel: actor_critic_forward.1
$region0: #{actor_critic_forward.1}
  #allocation0 [shape = 'u32[]', space=smem, size = 0x4, offset = 0x4, fixed_abs, tag = 'smem constant byte address 0x4 - core index']
  #allocation1 [shape = 'u32[144,128]{1,0:T(1,128)}', space=vmem, size = 0x12000, scoped, tag = 'internal scratch']
  %s0 = inlined_call_operand.vmem [shape: f32[8,16], index: 0, kind: input, shape index: {}]
  %s1 = inlined_call_operand.vmem [shape: f32[16,128], index: 1, kind: input, shape index: {}]
  %s2 = inlined_call_operand.vmem [shape: f32[1,128], index: 2, kind: input, shape index: {}]
  %s3 = inlined_call_operand.vmem [shape: f32[128,128], index: 3, kind: input, shape index: {}]
  %s4 = inlined_call_operand.vmem [shape: f32[1,128], index: 4, kind: input, shape index: {}]
  %s5 = inlined_call_operand.vmem [shape: f32[128,128], index: 5, kind: input, shape index: {}]
  %s6 = inlined_call_operand.vmem [shape: f32[1,128], index: 6, kind: input, shape index: {}]
  %s7 = inlined_call_operand.vmem [shape: f32[8,128], index: 7, kind: output, shape index: {}]
  %s8 = sld [smem:[#allocation0]]
  $region38: #{actor_critic_forward.1} parent=0
    _
  %s10 = ssub.s32 1, %s8
  %s11 = scalar_select 0, %s10, %s8
  // Predicated region
  $region2: #{actor_critic_forward.1} parent=0 // pred_check
    _
  $region3: #{actor_critic_forward.1} parent=0 // pred_check_branch
    %13 = sbr.rel (0) target = $region5
  $region4: #{actor_critic_forward.1} parent=0 // pred_region
    _
  $region5: #{actor_critic_forward.1} parent=0 // pred_fallthru
    _
  // Predicated region
  $region6: #{actor_critic_forward.1} parent=0 // pred_check
    _
  $region7: #{actor_critic_forward.1} parent=0 // pred_check_branch
    %15 = sbr.rel (0) target = $region9
  $region8: #{actor_critic_forward.1} parent=0 // pred_region
    _
  $region9: #{actor_critic_forward.1} parent=0 // pred_fallthru
    _
  // Predicated region
  $region10: #{actor_critic_forward.1} parent=0 // pred_check
    _
  $region11: #{actor_critic_forward.1} parent=0 // pred_check_branch
    %17 = sbr.rel (0) target = $region13
  $region12: #{actor_critic_forward.1} parent=0 // pred_region
    _
  $region13: #{actor_critic_forward.1} parent=0 // pred_fallthru
    _
  // Predicated region
  $region14: #{actor_critic_forward.1} parent=0 // pred_check
    _
  $region15: #{actor_critic_forward.1} parent=0 // pred_check_branch
    %19 = sbr.rel (0) target = $region17
  $region16: #{actor_critic_forward.1} parent=0 // pred_region
    _
  $region17: #{actor_critic_forward.1} parent=0 // pred_fallthru
    _
  // Predicated region
  $region18: #{actor_critic_forward.1} parent=0 // pred_check
    _
  $region19: #{actor_critic_forward.1} parent=0 // pred_check_branch
    %21 = sbr.rel (0) target = $region21
  $region20: #{actor_critic_forward.1} parent=0 // pred_region
    _
  $region21: #{actor_critic_forward.1} parent=0 // pred_fallthru
    _
  // Predicated region
  $region22: #{actor_critic_forward.1} parent=0 // pred_check
    _
  $region23: #{actor_critic_forward.1} parent=0 // pred_check_branch
    %23 = sbr.rel (0) target = $region25
  $region24: #{actor_critic_forward.1} parent=0 // pred_region
    _
  $region25: #{actor_critic_forward.1} parent=0 // pred_fallthru
    _
  // Predicated region
  $region26: #{actor_critic_forward.1} parent=0 // pred_check
    _
  $region27: #{actor_critic_forward.1} parent=0 // pred_check_branch
    %25 = sbr.rel (0) target = $region29
  $region28: #{actor_critic_forward.1} parent=0 // pred_region
    _
  $region29: #{actor_critic_forward.1} parent=0 // pred_fallthru
    _
  %v26 = vld [vmem:[%s0] sm:$0xff]
  %v27 = vld [vmem:[%s1] sm:$0xff]
  %v28 = vld [vmem:[%s1 + $0x8] sm:$0xff]
  %v29 = vld [vmem:[%s2] sm:$0x1]
  %v31 = vlaneseq
  %v32 = vshrl.u32 %v31, 7
  %v33 = vsub.s32 0, %v32
  %v34 = vrot.slane %v29, %v33
  %vm36 = vcmask 130048
  %v38 = vsel %vm36, %v26, 0
  %40 = vmatprep.subr.mxu0 0.0
  %41 = vmatpush1.msra.mxu0 0.0
  %42 = vmatprep.subr.mxu0 0.0
  %43 = vmatpush1.msra.mxu0 0.0
  %44 = vmatprep.subr.mxu0 0.0
  %45 = vmatpush1.msra.mxu0 0.0
  %46 = vmatprep.subr.mxu0 0.0
  %47 = vmatpush1.msra.mxu0 0.0
  %48 = vmatprep.subr.mxu0 0.0
  %49 = vmatpush1.msra.mxu0 0.0
  %50 = vmatprep.subr.mxu0 0.0
  %51 = vmatpush1.msra.mxu0 0.0
  %52 = vmatprep.subr.mxu0 0.0
  %53 = vmatpush1.msra.mxu0 0.0
  %54 = vmatprep.subr.mxu0 0.0
  %55 = vmatpush1.msra.mxu0 0.0
  %56 = vmatprep.subr.mxu0 0.0
  %57 = vmatpush1.msra.mxu0 0.0
  %58 = vmatprep.subr.mxu0 0.0
  %59 = vmatpush1.msra.mxu0 0.0
  %60 = vmatprep.subr.mxu0 0.0
  %61 = vmatpush1.msra.mxu0 0.0
  %62 = vmatprep.subr.mxu0 0.0
  %63 = vmatpush1.msra.mxu0 0.0
  %64 = vmatprep.subr.mxu0 0.0
  %65 = vmatpush1.msra.mxu0 0.0
  %66 = vmatprep.subr.mxu0 0.0
  %67 = vmatpush1.msra.mxu0 0.0
  %68 = vmatprep.subr.mxu0 0.0
  %69 = vmatpush1.msra.mxu0 %v28
  %70 = vmatprep.subr.mxu0 0.0
  %71 = vmatpush1.msra.mxu0 %v27
  %72 = vmatprep.subr.mxu0 0.0
  %73 = vmatpush2.msra.mxu0 0.0
  %74 = vmatprep.subr.mxu0 0.0
  %75 = vmatpush2.msra.mxu0 0.0
  %76 = vmatprep.subr.mxu0 0.0
  %77 = vmatpush2.msra.mxu0 0.0
  %78 = vmatprep.subr.mxu0 0.0
  %79 = vmatpush2.msra.mxu0 0.0
  %80 = vmatprep.subr.mxu0 0.0
  %81 = vmatpush2.msra.mxu0 0.0
  %82 = vmatprep.subr.mxu0 0.0
  %83 = vmatpush2.msra.mxu0 0.0
  %84 = vmatprep.subr.mxu0 0.0
  %85 = vmatpush2.msra.mxu0 0.0
  %86 = vmatprep.subr.mxu0 0.0
  %87 = vmatpush2.msra.mxu0 0.0
  %88 = vmatprep.subr.mxu0 0.0
  %89 = vmatpush2.msra.mxu0 0.0
  %90 = vmatprep.subr.mxu0 0.0
  %91 = vmatpush2.msra.mxu0 0.0
  %92 = vmatprep.subr.mxu0 0.0
  %93 = vmatpush2.msra.mxu0 0.0
  %94 = vmatprep.subr.mxu0 0.0
  %95 = vmatpush2.msra.mxu0 0.0
  %96 = vmatprep.subr.mxu0 0.0
  %97 = vmatpush2.msra.mxu0 0.0
  %98 = vmatprep.subr.mxu0 0.0
  %99 = vmatpush2.msra.mxu0 0.0
  %100 = vmatprep.subr.mxu0 0.0
  %101 = vmatpush2.msra.mxu0 0.0
  %102 = vmatprep.subr.mxu0 0.0
  %103 = vmatpush2.msra.mxu0 0.0
  %104 = vmatprep.mubr.f32.mxu0 0.0
  %105 = vmatmul.mubr.f32.gmra.mxu0 %v38
  %v106 = vpop.f32.mrf.mxu0
  %v107 = vadd.f32 %v34, %v106
  %v108 = vpop.f32.mrf.mxu0
  %109 = vdwg.mxu0
  %v110 = vtanh.pop %v107
  %v111 = vld [vmem:[%s3] sm:$0xff]
  %v112 = vld [vmem:[%s3 + $0x8] sm:$0xff]
  %v113 = vld [vmem:[%s3 + $0x10] sm:$0xff]
  %v114 = vld [vmem:[%s3 + $0x18] sm:$0xff]
  %v115 = vld [vmem:[%s3 + $0x20] sm:$0xff]
  %v116 = vld [vmem:[%s3 + $0x28] sm:$0xff]
  %v117 = vld [vmem:[%s3 + $0x30] sm:$0xff]
  %v118 = vld [vmem:[%s3 + $0x38] sm:$0xff]
  %v119 = vld [vmem:[%s3 + $0x40] sm:$0xff]
  %v120 = vld [vmem:[%s3 + $0x48] sm:$0xff]
  %v121 = vld [vmem:[%s3 + $0x50] sm:$0xff]
  %v122 = vld [vmem:[%s3 + $0x58] sm:$0xff]
  %v123 = vld [vmem:[%s3 + $0x60] sm:$0xff]
  %v124 = vld [vmem:[%s3 + $0x68] sm:$0xff]
  %v125 = vld [vmem:[%s3 + $0x70] sm:$0xff]
  %v126 = vld [vmem:[%s3 + $0x78] sm:$0xff]
  %v127 = vld [vmem:[%s4] sm:$0x1]
  %v129 = vlaneseq
  %v130 = vshrl.u32 %v129, 7
  %v131 = vsub.s32 0, %v130
  %v132 = vrot.slane %v127, %v131
  %134 = vmatprep.subr.mxu0 0.0
  %135 = vmatpush1.msra.mxu0 %v126
  %136 = vmatprep.subr.mxu0 0.0
  %137 = vmatpush1.msra.mxu0 %v125
  %138 = vmatprep.subr.mxu0 0.0
  %139 = vmatpush1.msra.mxu0 %v124
  %140 = vmatprep.subr.mxu0 0.0
  %141 = vmatpush1.msra.mxu0 %v123
  %142 = vmatprep.subr.mxu0 0.0
  %143 = vmatpush1.msra.mxu0 %v122
  %144 = vmatprep.subr.mxu0 0.0
  %145 = vmatpush1.msra.mxu0 %v121
  %146 = vmatprep.subr.mxu0 0.0
  %147 = vmatpush1.msra.mxu0 %v120
  %148 = vmatprep.subr.mxu0 0.0
  %149 = vmatpush1.msra.mxu0 %v119
  %150 = vmatprep.subr.mxu0 0.0
  %151 = vmatpush1.msra.mxu0 %v118
  %152 = vmatprep.subr.mxu0 0.0
  %153 = vmatpush1.msra.mxu0 %v117
  %154 = vmatprep.subr.mxu0 0.0
  %155 = vmatpush1.msra.mxu0 %v116
  %156 = vmatprep.subr.mxu0 0.0
  %157 = vmatpush1.msra.mxu0 %v115
  %158 = vmatprep.subr.mxu0 0.0
  %159 = vmatpush1.msra.mxu0 %v114
  %160 = vmatprep.subr.mxu0 0.0
  %161 = vmatpush1.msra.mxu0 %v113
  %162 = vmatprep.subr.mxu0 0.0
  %163 = vmatpush1.msra.mxu0 %v112
  %164 = vmatprep.subr.mxu0 0.0
  %165 = vmatpush1.msra.mxu0 %v111
  %166 = vmatprep.subr.mxu0 0.0
  %167 = vmatpush2.msra.mxu0 0.0
  %168 = vmatprep.subr.mxu0 0.0
  %169 = vmatpush2.msra.mxu0 0.0
  %170 = vmatprep.subr.mxu0 0.0
  %171 = vmatpush2.msra.mxu0 0.0
  %172 = vmatprep.subr.mxu0 0.0
  %173 = vmatpush2.msra.mxu0 0.0
  %174 = vmatprep.subr.mxu0 0.0
  %175 = vmatpush2.msra.mxu0 0.0
  %176 = vmatprep.subr.mxu0 0.0
  %177 = vmatpush2.msra.mxu0 0.0
  %178 = vmatprep.subr.mxu0 0.0
  %179 = vmatpush2.msra.mxu0 0.0
  %180 = vmatprep.subr.mxu0 0.0
  %181 = vmatpush2.msra.mxu0 0.0
  %182 = vmatprep.subr.mxu0 0.0
  %183 = vmatpush2.msra.mxu0 0.0
  %184 = vmatprep.subr.mxu0 0.0
  %185 = vmatpush2.msra.mxu0 0.0
  %186 = vmatprep.subr.mxu0 0.0
  %187 = vmatpush2.msra.mxu0 0.0
  %188 = vmatprep.subr.mxu0 0.0
  %189 = vmatpush2.msra.mxu0 0.0
  %190 = vmatprep.subr.mxu0 0.0
  %191 = vmatpush2.msra.mxu0 0.0
  %192 = vmatprep.subr.mxu0 0.0
  %193 = vmatpush2.msra.mxu0 0.0
  %194 = vmatprep.subr.mxu0 0.0
  %195 = vmatpush2.msra.mxu0 0.0
  %196 = vmatprep.subr.mxu0 0.0
  %197 = vmatpush2.msra.mxu0 0.0
  %198 = vmatprep.mubr.f32.mxu0 0.0
  %199 = vmatmul.mubr.f32.gmra.mxu0 %v110
  %v200 = vpop.f32.mrf.mxu0
  %v201 = vadd.f32 %v132, %v200
  %v202 = vpop.f32.mrf.mxu0
  %203 = vdwg.mxu0
  %v204 = vtanh.pop %v201
  %v205 = vld [vmem:[%s5] sm:$0xff]
  %v206 = vld [vmem:[%s5 + $0x8] sm:$0xff]
  %v207 = vld [vmem:[%s5 + $0x10] sm:$0xff]
  %v208 = vld [vmem:[%s5 + $0x18] sm:$0xff]
  %v209 = vld [vmem:[%s5 + $0x20] sm:$0xff]
  %v210 = vld [vmem:[%s5 + $0x28] sm:$0xff]
  %v211 = vld [vmem:[%s5 + $0x30] sm:$0xff]
  %v212 = vld [vmem:[%s5 + $0x38] sm:$0xff]
  %v213 = vld [vmem:[%s5 + $0x40] sm:$0xff]
  %v214 = vld [vmem:[%s5 + $0x48] sm:$0xff]
  %v215 = vld [vmem:[%s5 + $0x50] sm:$0xff]
  %v216 = vld [vmem:[%s5 + $0x58] sm:$0xff]
  %v217 = vld [vmem:[%s5 + $0x60] sm:$0xff]
  %v218 = vld [vmem:[%s5 + $0x68] sm:$0xff]
  %v219 = vld [vmem:[%s5 + $0x70] sm:$0xff]
  %v220 = vld [vmem:[%s5 + $0x78] sm:$0xff]
  %v221 = vld [vmem:[%s6] sm:$0x1]
  %v223 = vlaneseq
  %v224 = vshrl.u32 %v223, 7
  %v225 = vsub.s32 0, %v224
  %v226 = vrot.slane %v221, %v225
  %228 = vmatprep.subr.mxu0 0.0
  %229 = vmatpush1.msra.mxu0 %v220
  %230 = vmatprep.subr.mxu0 0.0
  %231 = vmatpush1.msra.mxu0 %v219
  %232 = vmatprep.subr.mxu0 0.0
  %233 = vmatpush1.msra.mxu0 %v218
  %234 = vmatprep.subr.mxu0 0.0
  %235 = vmatpush1.msra.mxu0 %v217
  %236 = vmatprep.subr.mxu0 0.0
  %237 = vmatpush1.msra.mxu0 %v216
  %238 = vmatprep.subr.mxu0 0.0
  %239 = vmatpush1.msra.mxu0 %v215
  %240 = vmatprep.subr.mxu0 0.0
  %241 = vmatpush1.msra.mxu0 %v214
  %242 = vmatprep.subr.mxu0 0.0
  %243 = vmatpush1.msra.mxu0 %v213
  %244 = vmatprep.subr.mxu0 0.0
  %245 = vmatpush1.msra.mxu0 %v212
  %246 = vmatprep.subr.mxu0 0.0
  %247 = vmatpush1.msra.mxu0 %v211
  %248 = vmatprep.subr.mxu0 0.0
  %249 = vmatpush1.msra.mxu0 %v210
  %250 = vmatprep.subr.mxu0 0.0
  %251 = vmatpush1.msra.mxu0 %v209
  %252 = vmatprep.subr.mxu0 0.0
  %253 = vmatpush1.msra.mxu0 %v208
  %254 = vmatprep.subr.mxu0 0.0
  %255 = vmatpush1.msra.mxu0 %v207
  %256 = vmatprep.subr.mxu0 0.0
  %257 = vmatpush1.msra.mxu0 %v206
  %258 = vmatprep.subr.mxu0 0.0
  %259 = vmatpush1.msra.mxu0 %v205
  %260 = vmatprep.subr.mxu0 0.0
  %261 = vmatpush2.msra.mxu0 0.0
  %262 = vmatprep.subr.mxu0 0.0
  %263 = vmatpush2.msra.mxu0 0.0
  %264 = vmatprep.subr.mxu0 0.0
  %265 = vmatpush2.msra.mxu0 0.0
  %266 = vmatprep.subr.mxu0 0.0
  %267 = vmatpush2.msra.mxu0 0.0
  %268 = vmatprep.subr.mxu0 0.0
  %269 = vmatpush2.msra.mxu0 0.0
  %270 = vmatprep.subr.mxu0 0.0
  %271 = vmatpush2.msra.mxu0 0.0
  %272 = vmatprep.subr.mxu0 0.0
  %273 = vmatpush2.msra.mxu0 0.0
  %274 = vmatprep.subr.mxu0 0.0
  %275 = vmatpush2.msra.mxu0 0.0
  %276 = vmatprep.subr.mxu0 0.0
  %277 = vmatpush2.msra.mxu0 0.0
  %278 = vmatprep.subr.mxu0 0.0
  %279 = vmatpush2.msra.mxu0 0.0
  %280 = vmatprep.subr.mxu0 0.0
  %281 = vmatpush2.msra.mxu0 0.0
  %282 = vmatprep.subr.mxu0 0.0
  %283 = vmatpush2.msra.mxu0 0.0
  %284 = vmatprep.subr.mxu0 0.0
  %285 = vmatpush2.msra.mxu0 0.0
  %286 = vmatprep.subr.mxu0 0.0
  %287 = vmatpush2.msra.mxu0 0.0
  %288 = vmatprep.subr.mxu0 0.0
  %289 = vmatpush2.msra.mxu0 0.0
  %290 = vmatprep.subr.mxu0 0.0
  %291 = vmatpush2.msra.mxu0 0.0
  %292 = vmatprep.mubr.f32.mxu0 0.0
  %293 = vmatmul.mubr.f32.gmra.mxu0 %v204
  %v294 = vpop.f32.mrf.mxu0
  %v295 = vadd.f32 %v226, %v294
  %v296 = vpop.f32.mrf.mxu0
  %297 = vdwg.mxu0
  %v298 = vlaneseq
  %v299 = vand.u32 %v298, 127
  %vm300 = vcmp.lt.s32.totalorder %v299, 4
  %v301 = vsel %vm300, %v295, -1e+30
  %302 = vmax.xlane.f32.xlu0 %v301
  %v303 = vpop.xlane.xlu0 %302
  %v304 = vsub.f32 %v301, %v303
  %v305 = vmul.f32 %v304, 1.442695
  %v306 = vpow.pop %v305
  %307 = vadd.xlane.f32.xlu0 %v306
  %v308 = vpop.xlane.xlu0 %307
  %v309 = vrcp.pop %v308
  %v310 = vmul.f32 %v306, %v309
  %vm311 = vcmp.eq.s32.totalorder %v299, 4
  %v312 = vsel %vm311, %v295, 0.0
  %v313 = vsel %vm300, %v310, %v312
  %314 = vst [vmem:[%s7] sm:$0xff] %v313
  // Predicated region
  $region30: #{actor_critic_forward.1} parent=0 // pred_check
    _
  $region31: #{actor_critic_forward.1} parent=0 // pred_check_branch
    %316 = sbr.rel (0) target = $region33
  $region32: #{actor_critic_forward.1} parent=0 // pred_region
    _
  $region33: #{actor_critic_forward.1} parent=0 // pred_fallthru
    _
  // Predicated region
  $region34: #{actor_critic_forward.1} parent=0 // pred_check
    _
  $region35: #{actor_critic_forward.1} parent=0 // pred_check_branch
    %318 = sbr.rel (0) target = $region37
  $region36: #{actor_critic_forward.1} parent=0 // pred_region
    _
  $region37: #{actor_critic_forward.1} parent=0 // pred_fallthru
    _

</llo_original>
